<compile_context>
chip_gen: v6e
topology: v6e:2x2x1
jax: 0.10.0
libtpu: 0.0.40
codegen_flags: <defaults>
</compile_context>

<pallas_src>
import functools

import jax
import jax.numpy as jnp
from jax.experimental import pallas as pl
from jax.experimental.pallas import tpu as pltpu


_VMEM_LIMIT_BYTES = 32 * 1024 * 1024   # explicit, generation-safe (v5e/v6e/v7x)
_BLOCK_ELEMS = 1024 * 1024             # ~4 MiB f32 per block
_MAX_LANES = 4096                      # lane-axis cap per block (multiple of 128)


def _pick_tiles(n_rows, n_lanes):
    """Pick (tile_r, tile_l) obeying the (8,128) rule and the VMEM budget."""
    # Lane tile: whole extent if small (block dim == full dim is always legal,
    # even when not a multiple of 128); otherwise a 128-multiple cap.
    tile_l = n_lanes if n_lanes <= _MAX_LANES else _MAX_LANES
    max_rows = max(8, ((_BLOCK_ELEMS // tile_l) // 8) * 8)
    # If the whole row extent fits, use it; otherwise use a multiple of 8 and
    # let Pallas handle the edge block.
    tile_r = n_rows if n_rows <= max_rows else max_rows
    return tile_r, tile_l


# -----------------------------------------------------------------------------
# Kernel 1: per-row sum and sum-of-squares (reduction over the lane axis).
# -----------------------------------------------------------------------------
def _stats_kernel(x_ref, rsum_ref, rsq_ref, acc_s, acc_q,
                  *, lanes_total, tile_l, mask_lanes):
    j = pl.program_id(1)

    @pl.when(j == 0)
    def _():
        acc_s[...] = jnp.zeros_like(acc_s)
        acc_q[...] = jnp.zeros_like(acc_q)

    x = x_ref[...].astype(jnp.float32)
    if mask_lanes:  # static: only emitted when H*W is not a multiple of tile_l
        lane = jax.lax.broadcasted_iota(jnp.int32, x.shape, 1) + j * tile_l
        x = jnp.where(lane < lanes_total, x, 0.0)

    # Lane-parallel accumulation (pure VPU); cross-lane reduce only at the end.
    acc_s[...] += x
    acc_q[...] += x * x

    @pl.when(j == pl.num_programs(1) - 1)
    def _():
        rsum_ref[...] = jnp.sum(acc_s[...], axis=1, keepdims=True)
        rsq_ref[...] = jnp.sum(acc_q[...], axis=1, keepdims=True)


def _row_stats(x2d, tile_r, tile_l):
    """x2d: (M, L) -> per-row sum and sum-of-squares, each (M, 1) float32."""
    M, L = x2d.shape
    grid = (pl.cdiv(M, tile_r), pl.cdiv(L, tile_l))
    kernel = functools.partial(
        _stats_kernel, lanes_total=L, tile_l=tile_l,
        mask_lanes=(L % tile_l != 0))
    return pl.pallas_call(
        kernel,
        out_shape=(
            jax.ShapeDtypeStruct((M, 1), jnp.float32),
            jax.ShapeDtypeStruct((M, 1), jnp.float32),
        ),
        grid_spec=pltpu.PrefetchScalarGridSpec(
            num_scalar_prefetch=0,
            grid=grid,
            in_specs=[pl.BlockSpec((tile_r, tile_l), lambda i, j: (i, j))],
            out_specs=(
                pl.BlockSpec((tile_r, 1), lambda i, j: (i, 0)),
                pl.BlockSpec((tile_r, 1), lambda i, j: (i, 0)),
            ),
            scratch_shapes=[
                pltpu.VMEM((tile_r, tile_l), jnp.float32),
                pltpu.VMEM((tile_r, tile_l), jnp.float32),
            ],
        ),
        compiler_params=pltpu.CompilerParams(
            dimension_semantics=("parallel", "arbitrary"),
            vmem_limit_bytes=_VMEM_LIMIT_BYTES,
        ),
    )(x2d)


# -----------------------------------------------------------------------------
# Kernel 2: elementwise affine  y = (x + shift_row) * scale_row, with the
# per-row (= per (sample, channel)) column broadcast along the lane axis.
# -----------------------------------------------------------------------------
def _affine_kernel(x_ref, shift_ref, scale_ref, y_ref):
    x = x_ref[...].astype(jnp.float32)
    y_ref[...] = ((x + shift_ref[...]) * scale_ref[...]).astype(y_ref.dtype)


def _affine(x2d, shift_rows, scale_rows, tile_r, tile_l):
    M, L = x2d.shape
    grid = (pl.cdiv(M, tile_r), pl.cdiv(L, tile_l))
    return pl.pallas_call(
        _affine_kernel,
        out_shape=jax.ShapeDtypeStruct((M, L), x2d.dtype),
        grid_spec=pltpu.PrefetchScalarGridSpec(
            num_scalar_prefetch=0,
            grid=grid,
            in_specs=[
                pl.BlockSpec((tile_r, tile_l), lambda i, j: (i, j)),
                pl.BlockSpec((tile_r, 1), lambda i, j: (i, 0)),
                pl.BlockSpec((tile_r, 1), lambda i, j: (i, 0)),
            ],
            out_specs=pl.BlockSpec((tile_r, tile_l), lambda i, j: (i, j)),
        ),
        compiler_params=pltpu.CompilerParams(
            dimension_semantics=("parallel", "parallel"),
            vmem_limit_bytes=_VMEM_LIMIT_BYTES,
        ),
    )(x2d, shift_rows, scale_rows)


# -----------------------------------------------------------------------------
# Wrapper mimicking ActNorm2d.forward (data-dependent initialization path).
# The stateful parts of the torch module (initialized flag, in-place
# Parameter .data.copy_) are modelled functionally: bias / weight are returned.
# -----------------------------------------------------------------------------
@jax.jit
def actnorm2d_forward(x_nchw, logp):
    N, C, H, W = x_nchw.shape
    M, L = N * C, H * W

    # Free reshape (no transpose): rows = (n, c) pairs, lanes = H*W.
    x2d = x_nchw.reshape(M, L)
    tile_r, tile_l = _pick_tiles(M, L)

    # Pass 1: per-row stats, folded to per-channel in the (tiny) wrapper.
    rsum, rsq = _row_stats(x2d, tile_r, tile_l)      # (M, 1) each
    csum = rsum.reshape(N, C).sum(axis=0)            # (C,)
    csq = rsq.reshape(N, C).sum(axis=0)              # (C,)
    n = jnp.float32(N * L)
    mean = csum / n
    # One-pass unbiased variance (torch.var default ddof=1); the 0.2 clamp
    # matches torch.max(batch_var, 0.2).
    var = (csq - n * mean * mean) / (n - 1.0)
    var = jnp.maximum(var, jnp.float32(0.2))
    bias = -mean                                     # (C,)
    weight = -0.5 * jnp.log(var)                     # (C,)
    scale = jnp.exp(weight)                          # exp precomputed once

    # Per-row shift/scale columns (row = n*C + c), broadcast along lanes in-kernel.
    shift_rows = jnp.tile(bias, N).reshape(M, 1)
    scale_rows = jnp.tile(scale, N).reshape(M, 1)

    # Pass 2: hot path y = (x + bias) * exp(weight).
    y2d = _affine(x2d, shift_rows, scale_rows, tile_r, tile_l)
    y = y2d.reshape(N, C, H, W)

    # logdetgrad = H*W * sum(weight), identical per sample.
    logdet = jnp.sum(weight) * jnp.float32(L)
    logdet = jnp.full((N, 1), logdet, dtype=logp.dtype)
    return y, logp - logdet, bias, weight


def _reference(x_nchw, logp):
    """Pure-JAX reference of the torch forward (uninitialized path)."""
    N, C, H, W = x_nchw.shape
    x_t = jnp.transpose(x_nchw, (1, 0, 2, 3)).reshape(C, -1)
    mean = jnp.mean(x_t, axis=1)
    var = jnp.var(x_t, axis=1, ddof=1)
    var = jnp.maximum(var, 0.2)
    bias = -mean
    weight = -0.5 * jnp.log(var)
    b = bias.reshape(1, C, 1, 1)
    w = weight.reshape(1, C, 1, 1)
    y = (x_nchw + b) * jnp.exp(w)
    logdet = jnp.broadcast_to(w, x_nchw.shape).reshape(N, -1).sum(1, keepdims=True)
    return y, logp - logdet, bias, weight


if __name__ == "__main__":
    key = jax.random.PRNGKey(0)
    kx, kp = jax.random.split(key)
    N, C, H, W = 2, 4, 16, 16
    x = jax.random.normal(kx, (N, C, H, W), dtype=jnp.float32) * 1.7 + 0.3
    logp = jax.random.normal(kp, (N, 1), dtype=jnp.float32)

    y, logp_out, bias, weight = actnorm2d_forward(x, logp)
    jax.block_until_ready((y, logp_out, bias, weight))

    y_ref, logp_ref, bias_ref, weight_ref = _reference(x, logp)
    assert jnp.allclose(y, y_ref, atol=1e-4, rtol=1e-4), "y mismatch"
    assert jnp.allclose(logp_out, logp_ref, atol=1e-4, rtol=1e-4), "logp mismatch"
    assert jnp.allclose(bias, bias_ref, atol=1e-4, rtol=1e-4), "bias mismatch"
    assert jnp.allclose(weight, weight_ref, atol=1e-4, rtol=1e-4), "weight mismatch"

    print("KERNEL_OK")
</pallas_src>

<mosaic_0001>
module attributes {stable_mosaic.version = 11 : i64} {
  func.func @_stats_kernel(%arg0: i32, %arg1: i32, %arg2: memref<8x256xf32, #tpu.memory_space<vmem>>, %arg3: memref<8x1xf32, #tpu.memory_space<vmem>>, %arg4: memref<8x1xf32, #tpu.memory_space<vmem>>, %arg5: memref<8x256xf32, #tpu.memory_space<vmem>>, %arg6: memref<8x256xf32, #tpu.memory_space<vmem>>) attributes {dimension_semantics = [#tpu.dimension_semantics<parallel>, #tpu.dimension_semantics<arbitrary>], iteration_bounds = array<i64: 1, 1>, scalar_prefetch = 0 : i64, scratch_operands = 2 : i64, tpu.core_type = #tpu.core_type<tc>, window_params = [{transform_indices = @transform_0, window_bounds = array<i64: 8, 256>}, {transform_indices = @transform_1, window_bounds = array<i64: 8, 1>}, {transform_indices = @transform_2, window_bounds = array<i64: 8, 1>}]} {
    %c0_i32 = arith.constant 0 : i32
    %0 = arith.cmpi eq, %arg1, %c0_i32 : i32
    %1 = arith.extui %0 : i1 to i32
    %c0_i32_0 = arith.constant 0 : i32
    %2 = arith.cmpi ne, %1, %c0_i32_0 : i32
    scf.if %2 {
      %cst = arith.constant 0.000000e+00 : f32
      %14 = vector.broadcast %cst : f32 to vector<8x256xf32>
      %c0_12 = arith.constant 0 : index
      %c0_13 = arith.constant 0 : index
      %15 = vector.load %arg5[%c0_12, %c0_13] : memref<8x256xf32, #tpu.memory_space<vmem>>, vector<8x256xf32>
      tpu.vector_store %arg5[%c0_12, %c0_13], %14 {strides = array<i32>} : memref<8x256xf32, #tpu.memory_space<vmem>>, vector<8x256xf32>,
      %cst_14 = arith.constant 0.000000e+00 : f32
      %16 = vector.broadcast %cst_14 : f32 to vector<8x256xf32>
      %c0_15 = arith.constant 0 : index
      %c0_16 = arith.constant 0 : index
      %17 = vector.load %arg6[%c0_15, %c0_16] : memref<8x256xf32, #tpu.memory_space<vmem>>, vector<8x256xf32>
      tpu.vector_store %arg6[%c0_15, %c0_16], %16 {strides = array<i32>} : memref<8x256xf32, #tpu.memory_space<vmem>>, vector<8x256xf32>,
    } else {
    }
    %c0 = arith.constant 0 : index
    %c0_1 = arith.constant 0 : index
    %3 = vector.load %arg2[%c0, %c0_1] : memref<8x256xf32, #tpu.memory_space<vmem>>, vector<8x256xf32>
    %c0_2 = arith.constant 0 : index
    %c0_3 = arith.constant 0 : index
    %4 = vector.load %arg5[%c0_2, %c0_3] : memref<8x256xf32, #tpu.memory_space<vmem>>, vector<8x256xf32>
    %5 = arith.addf %4, %3 : vector<8x256xf32>
    %c0_4 = arith.constant 0 : index
    %c0_5 = arith.constant 0 : index
    %6 = vector.load %arg5[%c0_4, %c0_5] : memref<8x256xf32, #tpu.memory_space<vmem>>, vector<8x256xf32>
    tpu.vector_store %arg5[%c0_4, %c0_5], %5 {strides = array<i32>} : memref<8x256xf32, #tpu.memory_space<vmem>>, vector<8x256xf32>,
    %c0_6 = arith.constant 0 : index
    %c0_7 = arith.constant 0 : index
    %7 = vector.load %arg6[%c0_6, %c0_7] : memref<8x256xf32, #tpu.memory_space<vmem>>, vector<8x256xf32>
    %8 = arith.mulf %3, %3 : vector<8x256xf32>
    %9 = arith.addf %7, %8 : vector<8x256xf32>
    %c0_8 = arith.constant 0 : index
    %c0_9 = arith.constant 0 : index
    %10 = vector.load %arg6[%c0_8, %c0_9] : memref<8x256xf32, #tpu.memory_space<vmem>>, vector<8x256xf32>
    tpu.vector_store %arg6[%c0_8, %c0_9], %9 {strides = array<i32>} : memref<8x256xf32, #tpu.memory_space<vmem>>, vector<8x256xf32>,
    %c0_i32_10 = arith.constant 0 : i32
    %11 = arith.cmpi eq, %arg1, %c0_i32_10 : i32
    %12 = arith.extui %11 : i1 to i32
    %c0_i32_11 = arith.constant 0 : i32
    %13 = arith.cmpi ne, %12, %c0_i32_11 : i32
    scf.if %13 {
      %c0_12 = arith.constant 0 : index
      %c0_13 = arith.constant 0 : index
      %14 = vector.load %arg5[%c0_12, %c0_13] : memref<8x256xf32, #tpu.memory_space<vmem>>, vector<8x256xf32>
      %cst = arith.constant dense<0.000000e+00> : vector<8xf32>
      %15 = vector.multi_reduction <add>, %14, %cst [1] : vector<8x256xf32> to vector<8xf32>
      %16 = vector.shape_cast %15 : vector<8xf32> to vector<8x1xf32>
      %c0_14 = arith.constant 0 : index
      %c0_15 = arith.constant 0 : index
      %17 = vector.load %arg3[%c0_14, %c0_15] : memref<8x1xf32, #tpu.memory_space<vmem>>, vector<8x1xf32>
      tpu.vector_store %arg3[%c0_14, %c0_15], %16 {strides = array<i32>} : memref<8x1xf32, #tpu.memory_space<vmem>>, vector<8x1xf32>,
      %c0_16 = arith.constant 0 : index
      %c0_17 = arith.constant 0 : index
      %18 = vector.load %arg6[%c0_16, %c0_17] : memref<8x256xf32, #tpu.memory_space<vmem>>, vector<8x256xf32>
      %cst_18 = arith.constant dense<0.000000e+00> : vector<8xf32>
      %19 = vector.multi_reduction <add>, %18, %cst_18 [1] : vector<8x256xf32> to vector<8xf32>
      %20 = vector.shape_cast %19 : vector<8xf32> to vector<8x1xf32>
      %c0_19 = arith.constant 0 : index
      %c0_20 = arith.constant 0 : index
      %21 = vector.load %arg4[%c0_19, %c0_20] : memref<8x1xf32, #tpu.memory_space<vmem>>, vector<8x1xf32>
      tpu.vector_store %arg4[%c0_19, %c0_20], %20 {strides = array<i32>} : memref<8x1xf32, #tpu.memory_space<vmem>>, vector<8x1xf32>,
    } else {
    }
    return
  }
  func.func @transform_0(%arg0: i32, %arg1: i32) -> (i32, i32) {
    %c0_i32 = arith.constant 0 : i32
    return %arg0, %arg1 : i32, i32
  }
  func.func @transform_1(%arg0: i32, %arg1: i32) -> (i32, i32) {
    %c0_i32 = arith.constant 0 : i32
    %c0_i32_0 = arith.constant 0 : i32
    return %arg0, %c0_i32 : i32, i32
  }
  func.func @transform_2(%arg0: i32, %arg1: i32) -> (i32, i32) {
    %c0_i32 = arith.constant 0 : i32
    %c0_i32_0 = arith.constant 0 : i32
    return %arg0, %c0_i32 : i32, i32
  }
}

module attributes {stable_mosaic.version = 11 : i64} {
  func.func @_affine_kernel(%arg0: i32, %arg1: i32, %arg2: memref<8x256xf32, #tpu.memory_space<vmem>>, %arg3: memref<8x1xf32, #tpu.memory_space<vmem>>, %arg4: memref<8x1xf32, #tpu.memory_space<vmem>>, %arg5: memref<8x256xf32, #tpu.memory_space<vmem>>) attributes {dimension_semantics = [#tpu.dimension_semantics<parallel>, #tpu.dimension_semantics<parallel>], iteration_bounds = array<i64: 1, 1>, scalar_prefetch = 0 : i64, scratch_operands = 0 : i64, tpu.core_type = #tpu.core_type<tc>, window_params = [{transform_indices = @transform_0, window_bounds = array<i64: 8, 256>}, {transform_indices = @transform_1, window_bounds = array<i64: 8, 1>}, {transform_indices = @transform_2, window_bounds = array<i64: 8, 1>}, {transform_indices = @transform_3, window_bounds = array<i64: 8, 256>}]} {
    %c0 = arith.constant 0 : index
    %c0_0 = arith.constant 0 : index
    %0 = vector.load %arg2[%c0, %c0_0] : memref<8x256xf32, #tpu.memory_space<vmem>>, vector<8x256xf32>
    %c0_1 = arith.constant 0 : index
    %c0_2 = arith.constant 0 : index
    %1 = vector.load %arg3[%c0_1, %c0_2] : memref<8x1xf32, #tpu.memory_space<vmem>>, vector<8x1xf32>
    %2 = vector.broadcast %1 : vector<8x1xf32> to vector<8x256xf32>
    %3 = arith.addf %0, %2 : vector<8x256xf32>
    %c0_3 = arith.constant 0 : index
    %c0_4 = arith.constant 0 : index
    %4 = vector.load %arg4[%c0_3, %c0_4] : memref<8x1xf32, #tpu.memory_space<vmem>>, vector<8x1xf32>
    %5 = vector.broadcast %4 : vector<8x1xf32> to vector<8x256xf32>
    %6 = arith.mulf %3, %5 : vector<8x256xf32>
    %c0_5 = arith.constant 0 : index
    %c0_6 = arith.constant 0 : index
    %7 = vector.load %arg5[%c0_5, %c0_6] : memref<8x256xf32, #tpu.memory_space<vmem>>, vector<8x256xf32>
    tpu.vector_store %arg5[%c0_5, %c0_6], %6 {strides = array<i32>} : memref<8x256xf32, #tpu.memory_space<vmem>>, vector<8x256xf32>,
    return
  }
  func.func @transform_0(%arg0: i32, %arg1: i32) -> (i32, i32) {
    %c0_i32 = arith.constant 0 : i32
    return %arg0, %arg1 : i32, i32
  }
  func.func @transform_1(%arg0: i32, %arg1: i32) -> (i32, i32) {
    %c0_i32 = arith.constant 0 : i32
    %c0_i32_0 = arith.constant 0 : i32
    return %arg0, %c0_i32 : i32, i32
  }
  func.func @transform_2(%arg0: i32, %arg1: i32) -> (i32, i32) {
    %c0_i32 = arith.constant 0 : i32
    %c0_i32_0 = arith.constant 0 : i32
    return %arg0, %c0_i32 : i32, i32
  }
  func.func @transform_3(%arg0: i32, %arg1: i32) -> (i32, i32) {
    %c0_i32 = arith.constant 0 : i32
    return %arg0, %arg1 : i32, i32
  }
}

</mosaic_0001>

<llo_original>
// kernel: tile.18
$region0: #{tile.18}
  #allocation0 [shape = 's32[1]{0}', space=sflag, size = 0x4, scoped, tag = 'scoped memory for tile.18']
  %s0 = inlined_call_operand.vmem [shape: f32[4], index: 0, kind: input, shape index: {}]
  %s1 = inlined_call_operand.vmem [shape: f32[2,4], index: 1, kind: output, shape index: {}]
  // Predicated region
  $region2: #{tile.18} parent=0 // pred_check
    _
  $region3: #{tile.18} parent=0 // pred_check_branch
    %3 = sbr.rel (0) target = $region5
  $region4: #{tile.18} parent=0 // pred_region
    _
  $region5: #{tile.18} parent=0 // pred_fallthru
    _
  %v4 = vld [vmem:[%s0] ss:$0 sm:$0xff]
  %5 = vst [vmem:[%s1] sm:$0x3] %v4

// kernel: tile.0
$region0: #{tile.0}
  %s0 = inlined_call_operand.vmem [shape: f32[2,4], index: 0, kind: input, shape index: {}]
  %s1 = inlined_call_operand.vmem [shape: f32[8,1], index: 1, kind: output, shape index: {}]
  $region1: #{tile.0} parent=0
    #allocation0 [shape = 'u8[4096]{0}', space=vmem, size = 0x1000, scoped, tag = 'scoped mem for input reshape']
    %s3 = sshll.u32 1, 2
    %s4 = ssub.s32 %s3, 1
    %v5 = vld [vmem:[%s0] sm:%s4]
    %6 = vst [vmem:[#allocation0] sm:%s4] %v5
    %v7 = vld [vmem:[#allocation0] sm:$0x3]
    %vm8 = vcmask 7168
    %9 = vst.msk [vmem:[%s1] ss:$4 sm:$0x3] %vm8, %v7
    %v10 = vld [vmem:[#allocation0] sm:$0x3]
    %11 = vrot.lane.b32.xlu0 %v10, 127
    %v12 = vpop.permute.xlu0 %11
    %vm13 = vcmask 7168
    %s14 = scalar_lea.vmem %s1, 1
    %15 = vst.msk [vmem:[%s14] ss:$4 sm:$0x3] %vm13, %v12
    %v16 = vld [vmem:[#allocation0] sm:$0x3]
    %17 = vrot.lane.b32.xlu0 %v16, 126
    %v18 = vpop.permute.xlu0 %17
    %vm19 = vcmask 7168
    %s20 = scalar_lea.vmem %s1, 2
    %21 = vst.msk [vmem:[%s20] ss:$4 sm:$0x3] %vm19, %v18
    %v22 = vld [vmem:[#allocation0] sm:$0x3]
    %23 = vrot.lane.b32.xlu0 %v22, 125
    %v24 = vpop.permute.xlu0 %23
    %vm25 = vcmask 7168
    %s26 = scalar_lea.vmem %s1, 3
    %27 = vst.msk [vmem:[%s26] ss:$4 sm:$0x3] %vm25, %v24

// kernel: actnorm2d_forward.2
$region0: #{actnorm2d_forward.2}
  #allocation0 [shape = 'u32[]', space=smem, size = 0x4, offset = 0x4, fixed_abs, tag = 'smem constant byte address 0x4 - core index']
  #allocation1 [shape = 'u32[144,128]{1,0:T(1,128)}', space=vmem, size = 0x12000, scoped, tag = 'internal scratch']
  #allocation2 [shape = 'f32[8,256]{1,0:T(8,128)}', space=vmem, size = 0x2000, scoped, tag = 'scratch operand']
  #allocation3 [shape = 'f32[8,256]{1,0:T(8,128)}', space=vmem, size = 0x2000, scoped, tag = 'scratch operand']
  %s0 = inlined_call_operand.vmem [shape: f32[8,256], index: 0, kind: input, shape index: {}]
  %s1 = inlined_call_operand.vmem [shape: f32[8,1], index: 1, kind: output, shape index: {0}]
  %s2 = inlined_call_operand.vmem [shape: f32[8,1], index: 2, kind: output, shape index: {1}]
  %3 = xla_tuple %s1, %s2
  %s4 = sld [smem:[#allocation0]]
  $region30: #{actnorm2d_forward.2} parent=0
    _
  %s6 = ssub.s32 1, %s4
  %s7 = scalar_select 0, %s6, %s4
  // Predicated region
  $region2: #{actnorm2d_forward.2} parent=0 // pred_check
    _
  $region3: #{actnorm2d_forward.2} parent=0 // pred_check_branch
    %9 = sbr.rel (0) target = $region5
  $region4: #{actnorm2d_forward.2} parent=0 // pred_region
    _
  $region5: #{actnorm2d_forward.2} parent=0 // pred_fallthru
    _
  %p10 = scmp.eq.s32.totalorder 0, 0
  // Predicated region
  $region6: #{actnorm2d_forward.2} parent=0 // pred_check
    %p11 = pneg %p10
  $region7: #{actnorm2d_forward.2} parent=0 // pred_check_branch
    %13 = sbr.rel (%p11) target = $region9
  $region8: #{actnorm2d_forward.2} parent=0 // pred_region
    %14 = vst [vmem:[#allocation2] sm:$0xff] 0.0
    %15 = vst [vmem:[#allocation2 + $0x8] sm:$0xff] 0.0
    %16 = vst [vmem:[#allocation3] sm:$0xff] 0.0
    %17 = vst [vmem:[#allocation3 + $0x8] sm:$0xff] 0.0
  $region9: #{actnorm2d_forward.2} parent=0 // pred_fallthru
    _
  %v18 = vld [vmem:[%s0] sm:$0xff]
  %v19 = vld [vmem:[%s0 + $0x8] sm:$0xff]
  %v20 = vld [vmem:[#allocation2] sm:$0xff]
  %v21 = vld [vmem:[#allocation2 + $0x8] sm:$0xff]
  %v22 = vadd.f32 %v20, %v18
  %v23 = vadd.f32 %v21, %v19
  %24 = vst [vmem:[#allocation2] sm:$0xff] %v22
  %25 = vst [vmem:[#allocation2 + $0x8] sm:$0xff] %v23
  %v26 = vld [vmem:[#allocation3] sm:$0xff]
  %v27 = vld [vmem:[#allocation3 + $0x8] sm:$0xff]
  %v28 = vmul.f32 %v18, %v18
  %v29 = vmul.f32 %v19, %v19
  %v30 = vadd.f32 %v26, %v28
  %v31 = vadd.f32 %v27, %v29
  %32 = vst [vmem:[#allocation3] sm:$0xff] %v30
  %33 = vst [vmem:[#allocation3 + $0x8] sm:$0xff] %v31
  // Predicated region
  $region10: #{actnorm2d_forward.2} parent=0 // pred_check
    %p34 = pneg %p10
  $region11: #{actnorm2d_forward.2} parent=0 // pred_check_branch
    %36 = sbr.rel (%p34) target = $region13
  $region12: #{actnorm2d_forward.2} parent=0 // pred_region
    %v37 = vld [vmem:[#allocation2] sm:$0xff]
    %v38 = vld [vmem:[#allocation2 + $0x8] sm:$0xff]
    %v39 = vadd.f32 %v37, %v38
    %40 = vadd.xlane.f32.xlu0 %v39
    %v41 = vpop.xlane.xlu0 %40
    %vm42 = vcmask 7168
    %43 = vst.msk [vmem:[%s1] sm:$0xff] %vm42, %v41
    %v44 = vld [vmem:[#allocation3] sm:$0xff]
    %v45 = vld [vmem:[#allocation3 + $0x8] sm:$0xff]
    %v46 = vadd.f32 %v44, %v45
    %47 = vadd.xlane.f32.xlu0 %v46
    %v48 = vpop.xlane.xlu0 %47
    %49 = vst.msk [vmem:[%s2] sm:$0xff] %vm42, %v48
  $region13: #{actnorm2d_forward.2} parent=0 // pred_fallthru
    _
  // Predicated region
  $region14: #{actnorm2d_forward.2} parent=0 // pred_check
    _
  $region15: #{actnorm2d_forward.2} parent=0 // pred_check_branch
    %51 = sbr.rel (0) target = $region17
  $region16: #{actnorm2d_forward.2} parent=0 // pred_region
    _
  $region17: #{actnorm2d_forward.2} parent=0 // pred_fallthru
    _
  // Predicated region
  $region18: #{actnorm2d_forward.2} parent=0 // pred_check
    _
  $region19: #{actnorm2d_forward.2} parent=0 // pred_check_branch
    %53 = sbr.rel (0) target = $region21
  $region20: #{actnorm2d_forward.2} parent=0 // pred_region
    _
  $region21: #{actnorm2d_forward.2} parent=0 // pred_fallthru
    _
  // Predicated region
  $region22: #{actnorm2d_forward.2} parent=0 // pred_check
    _
  $region23: #{actnorm2d_forward.2} parent=0 // pred_check_branch
    %55 = sbr.rel (0) target = $region25
  $region24: #{actnorm2d_forward.2} parent=0 // pred_region
    _
  $region25: #{actnorm2d_forward.2} parent=0 // pred_fallthru
    _
  // Predicated region
  $region26: #{actnorm2d_forward.2} parent=0 // pred_check
    _
  $region27: #{actnorm2d_forward.2} parent=0 // pred_check_branch
    %57 = sbr.rel (0) target = $region29
  $region28: #{actnorm2d_forward.2} parent=0 // pred_region
    _
  $region29: #{actnorm2d_forward.2} parent=0 // pred_fallthru
    _

// kernel: actnorm2d_forward.3
$region0: #{actnorm2d_forward.3}
  #allocation0 [shape = 'u32[]', space=smem, size = 0x4, offset = 0x4, fixed_abs, tag = 'smem constant byte address 0x4 - core index']
  #allocation1 [shape = 'u32[144,128]{1,0:T(1,128)}', space=vmem, size = 0x12000, scoped, tag = 'internal scratch']
  %s0 = inlined_call_operand.vmem [shape: f32[8,256], index: 0, kind: input, shape index: {}]
  %s1 = inlined_call_operand.vmem [shape: f32[8,1], index: 1, kind: input, shape index: {}]
  %s2 = inlined_call_operand.vmem [shape: f32[8,1], index: 2, kind: input, shape index: {}]
  %s3 = inlined_call_operand.vmem [shape: f32[8,256], index: 3, kind: output, shape index: {}]
  %s4 = sld [smem:[#allocation0]]
  $region22: #{actnorm2d_forward.3} parent=0
    _
  %s6 = ssub.s32 1, %s4
  %s7 = scalar_select 0, %s6, %s4
  // Predicated region
  $region2: #{actnorm2d_forward.3} parent=0 // pred_check
    _
  $region3: #{actnorm2d_forward.3} parent=0 // pred_check_branch
    %9 = sbr.rel (0) target = $region5
  $region4: #{actnorm2d_forward.3} parent=0 // pred_region
    _
  $region5: #{actnorm2d_forward.3} parent=0 // pred_fallthru
    _
  // Predicated region
  $region6: #{actnorm2d_forward.3} parent=0 // pred_check
    _
  $region7: #{actnorm2d_forward.3} parent=0 // pred_check_branch
    %11 = sbr.rel (0) target = $region9
  $region8: #{actnorm2d_forward.3} parent=0 // pred_region
    _
  $region9: #{actnorm2d_forward.3} parent=0 // pred_fallthru
    _
  // Predicated region
  $region10: #{actnorm2d_forward.3} parent=0 // pred_check
    _
  $region11: #{actnorm2d_forward.3} parent=0 // pred_check_branch
    %13 = sbr.rel (0) target = $region13
  $region12: #{actnorm2d_forward.3} parent=0 // pred_region
    _
  $region13: #{actnorm2d_forward.3} parent=0 // pred_fallthru
    _
  %v14 = vld [vmem:[%s0] sm:$0xff]
  %v15 = vld [vmem:[%s0 + $0x8] sm:$0xff]
  %v16 = vld [vmem:[%s1] sm:$0xff]
  %18 = vset.pattern.permute.xlu0 0
  %19 = vperm.xlu0 %18, %v16
  %v20 = vpop.permute.xlu0 %19
  %v22 = vadd.f32 %v14, %v20
  %v23 = vadd.f32 %v15, %v20
  %v24 = vld [vmem:[%s2] sm:$0xff]
  %26 = vset.pattern.permute.xlu0 0
  %27 = vperm.xlu0 %26, %v24
  %v28 = vpop.permute.xlu0 %27
  %v30 = vmul.f32 %v22, %v28
  %v31 = vmul.f32 %v23, %v28
  %32 = vst [vmem:[%s3] sm:$0xff] %v30
  %33 = vst [vmem:[%s3 + $0x8] sm:$0xff] %v31
  // Predicated region
  $region14: #{actnorm2d_forward.3} parent=0 // pred_check
    _
  $region15: #{actnorm2d_forward.3} parent=0 // pred_check_branch
    %35 = sbr.rel (0) target = $region17
  $region16: #{actnorm2d_forward.3} parent=0 // pred_region
    _
  $region17: #{actnorm2d_forward.3} parent=0 // pred_fallthru
    _
  // Predicated region
  $region18: #{actnorm2d_forward.3} parent=0 // pred_check
    _
  $region19: #{actnorm2d_forward.3} parent=0 // pred_check_branch
    %37 = sbr.rel (0) target = $region21
  $region20: #{actnorm2d_forward.3} parent=0 // pred_region
    _
  $region21: #{actnorm2d_forward.3} parent=0 // pred_fallthru
    _

</llo_original>
